<compile_context>
chip_gen: v7x
topology: tpu7x:2x2x1
jax: 0.10.0
libtpu: 0.0.40
codegen_flags: <defaults>
</compile_context>

<pallas_src>
import functools

import numpy as np
import jax
import jax.numpy as jnp
from jax.experimental import pallas as pl
from jax.experimental.pallas import tpu as pltpu


N_MOTIFS = 36
_LANE = 128
_SUBLANE = 8
_LANE_TILE_CAP = 512                      # tile cap along lane (128-mult) dims
_VMEM_LIMIT = 32 * 1024 * 1024            # explicit scoped-VMEM budget (fits v5e/v6e/v7x)

_PARAMS_3D = pltpu.CompilerParams(
    dimension_semantics=("parallel", "parallel", "arbitrary"),
    vmem_limit_bytes=_VMEM_LIMIT,
)


def _round_up(x, m):
    return (x + m - 1) // m * m


def _pad2(a, rows, cols):
    r, c = a.shape
    if r == rows and c == cols:
        return a
    return jnp.pad(a, ((0, rows - r), (0, cols - c)))


# ---------------------------------------------------------------------------
# Host-side adjacency reconstruction (cached, O(N^2) normalization).
# TODO(synk): MC is normally np.loadtxt of a motif R-counts file; it is
# synthesized deterministically here. tor_M is all zeros exactly as in the
# reference source.
def make_motif_data(n_nodes: int):
    MC = np.arange(N_MOTIFS, dtype=np.float64)
    tor_M = np.zeros((N_MOTIFS, n_nodes, n_nodes))
    return MC, tor_M


@functools.lru_cache(maxsize=8)
def build_adjacency(n_nodes: int):
    """Rebuild the normalized adjacency once per N.

    Returns (adj_norm [N,N] f32, diag [N] f32, is_diagonal bool)."""
    MC, tor_M = make_motif_data(n_nodes)
    MC_array = np.squeeze(MC.reshape(N_MOTIFS, 1))
    MC_array_index = np.argsort(MC_array)
    moti_adjacency = np.zeros((n_nodes, n_nodes))
    for i in range(N_MOTIFS):
        moti_adjacency += tor_M[MC_array_index[-i - 1]]
    adjacency = np.zeros((n_nodes, n_nodes)) + moti_adjacency

    # normalization(Mat) = D^-1/2 (Mat + I) D^-1/2 via diagonal scaling: O(N^2).
    mat = adjacency + np.eye(n_nodes)
    degree = mat.sum(1)
    d = np.power(degree, -0.5)
    adj_norm = (d[:, None] * mat * d[None, :]).astype(np.float32)

    off_diag = adj_norm - np.diag(np.diag(adj_norm))
    # NOTE: exact-zero test; real motif data with off-diagonal entries takes
    # the dense (two-matmul) path instead of the diagonal fast path.
    is_diagonal = not np.any(off_diag)
    diag = np.ascontiguousarray(np.diag(adj_norm)).astype(np.float32)
    return adj_norm, diag, is_diagonal


@functools.lru_cache(maxsize=8)
def _adjacency_device(n_nodes: int, n_p: int):
    """Padded, bf16, device-resident adjacency, cached per (N, padding)."""
    adj_np, _, _ = build_adjacency(n_nodes)
    adj_pad = np.zeros((n_p, n_p), np.float32)
    adj_pad[:n_nodes, :n_nodes] = adj_np
    return jnp.asarray(adj_pad, dtype=jnp.bfloat16)


@functools.lru_cache(maxsize=8)
def _diag_scale_device(n_nodes: int, n_p: int):
    """Padded, f32, device-resident per-row diagonal scale, cached per (N, padding)."""
    _, diag_np, _ = build_adjacency(n_nodes)
    scale = np.zeros((n_p, 1), np.float32)
    scale[:n_nodes, 0] = diag_np
    return jnp.asarray(scale)


# ---------------------------------------------------------------------------
# Kernels.  All use grid = (rows i, cols j, reduction k); the f32 output block
# (index (i, j), constant over k) is the accumulator — no scratch buffer.

def _matmul_accum_kernel(a_ref, b_ref, o_ref):
    @pl.when(pl.program_id(2) == 0)
    def _():
        o_ref[...] = jnp.zeros_like(o_ref)
    o_ref[...] += jnp.dot(a_ref[...], b_ref[...],
                          preferred_element_type=jnp.float32)


def _matmul_bias_sigmoid_kernel(a_ref, b_ref, bias_ref, o_ref):
    @pl.when(pl.program_id(2) == 0)
    def _():
        o_ref[...] = jnp.zeros_like(o_ref)
    o_ref[...] += jnp.dot(a_ref[...], b_ref[...],
                          preferred_element_type=jnp.float32)

    @pl.when(pl.program_id(2) == pl.num_programs(2) - 1)
    def _():
        o_ref[...] = jax.nn.sigmoid(o_ref[...] + bias_ref[...])


def _diag_gcn_kernel(scale_ref, x_ref, w_ref, bias_ref, o_ref):
    # out = sigmoid(diag_scale * (X @ W) + b); reduction over Din tiles.
    @pl.when(pl.program_id(2) == 0)
    def _():
        o_ref[...] = jnp.zeros_like(o_ref)
    o_ref[...] += jnp.dot(x_ref[...], w_ref[...],
                          preferred_element_type=jnp.float32)

    @pl.when(pl.program_id(2) == pl.num_programs(2) - 1)
    def _():
        o_ref[...] = jax.nn.sigmoid(scale_ref[...] * o_ref[...] + bias_ref[...])


# ---------------------------------------------------------------------------
# pallas_call wrappers.

def _pallas_matmul(a, b, *, tm, tn, tk):
    M, K = a.shape
    _, N = b.shape
    return pl.pallas_call(
        _matmul_accum_kernel,
        out_shape=jax.ShapeDtypeStruct((M, N), jnp.float32),
        grid=(M // tm, N // tn, K // tk),
        in_specs=[pl.BlockSpec((tm, tk), lambda i, j, k: (i, k)),
                  pl.BlockSpec((tk, tn), lambda i, j, k: (k, j))],
        out_specs=pl.BlockSpec((tm, tn), lambda i, j, k: (i, j)),
        compiler_params=_PARAMS_3D,
    )(a, b)


def _pallas_matmul_bias_sigmoid(a, b, bias2d, *, tm, tn, tk):
    M, K = a.shape
    _, N = b.shape
    return pl.pallas_call(
        _matmul_bias_sigmoid_kernel,
        out_shape=jax.ShapeDtypeStruct((M, N), jnp.float32),
        grid=(M // tm, N // tn, K // tk),
        in_specs=[pl.BlockSpec((tm, tk), lambda i, j, k: (i, k)),
                  pl.BlockSpec((tk, tn), lambda i, j, k: (k, j)),
                  pl.BlockSpec((1, tn), lambda i, j, k: (0, j))],
        out_specs=pl.BlockSpec((tm, tn), lambda i, j, k: (i, j)),
        compiler_params=_PARAMS_3D,
    )(a, b, bias2d)


def _pallas_diag_gcn(scale, x, w, bias2d, *, tm, tn, tk):
    M, K = x.shape
    _, N = w.shape
    return pl.pallas_call(
        _diag_gcn_kernel,
        out_shape=jax.ShapeDtypeStruct((M, N), jnp.float32),
        grid=(M // tm, N // tn, K // tk),
        in_specs=[pl.BlockSpec((tm, 1), lambda i, j, k: (i, 0)),
                  pl.BlockSpec((tm, tk), lambda i, j, k: (i, k)),
                  pl.BlockSpec((tk, tn), lambda i, j, k: (k, j)),
                  pl.BlockSpec((1, tn), lambda i, j, k: (0, j))],
        out_specs=pl.BlockSpec((tm, tn), lambda i, j, k: (i, j)),
        compiler_params=_PARAMS_3D,
    )(scale, x, w, bias2d)


# ---------------------------------------------------------------------------
# Tile selection.

def _pick_lane_tile(dim, cap=_LANE_TILE_CAP):
    """(padded_dim, tile) for a lane-granularity dimension (multiples of 128)."""
    padded = _round_up(dim, _LANE)
    if padded <= cap:
        return padded, padded
    padded = _round_up(dim, cap)
    return padded, cap


def _pick_row_tile_diag(n):
    """Row padding/tile for the diagonal path (sublane granularity only)."""
    if n >= 2048:
        tm = 512
    elif n >= 512:
        tm = 256
    elif n >= 128:
        tm = 128
    else:
        # Small N: halve so the parallel axis still has >= 2 programs (v7x 2 TCs).
        tm = _round_up(max(n // 2, _SUBLANE), _SUBLANE)
    return _round_up(n, tm), tm


def _pick_row_tile_dense(n):
    """Row padding/tile + adjacency reduction tile for the dense path.

    The adjacency's reduction (lane) dim needs 128-multiple tiles, so the node
    dimension is padded to lane granularity here."""
    if n <= 512:
        n_p = _round_up(n, _LANE)
        tk_adj = n_p
    else:
        n_p = _round_up(n, _LANE_TILE_CAP)
        tk_adj = _LANE_TILE_CAP
    if n_p >= 2048:
        tm = 512
    elif n_p >= 512:
        tm = 256
    elif n_p >= 256:
        tm = 128
    else:          # n_p == 128
        tm = 64    # keep 2 row programs for v7x
    return n_p, tm, tk_adj


# ---------------------------------------------------------------------------
def tma_graph_convolution(adjacency_arg, input_feature, weight, bias,
                          *, force_dense=False):
    # Like the PyTorch module, the passed-in adjacency is ignored and rebuilt
    # from motif data.
    del adjacency_arg
    n, d_in = input_feature.shape
    d_out = weight.shape[1]

    _, _, is_diag = build_adjacency(n)
    use_diag = is_diag and not force_dense

    din_p, td_in = _pick_lane_tile(d_in)
    dout_p, td_out = _pick_lane_tile(d_out)

    if use_diag:
        n_p, tm = _pick_row_tile_diag(n)
    else:
        n_p, tm, tk_adj = _pick_row_tile_dense(n)

    # bf16 MXU operands (f32 accumulation inside the kernels), lane-dense padding.
    x_p = _pad2(input_feature.astype(jnp.bfloat16), n_p, din_p)
    w_p = _pad2(weight.astype(jnp.bfloat16), din_p, dout_p)
    b_p = _pad2(bias.reshape(1, d_out).astype(jnp.float32), 1, dout_p)

    if use_diag:
        # Adjacency is diagonal (identity with the zero motif tensor): skip the
        # N x N matmul entirely; apply a per-row scale in the epilogue.
        scale = _diag_scale_device(n, n_p)
        out_p = _pallas_diag_gcn(scale, x_p, w_p, b_p, tm=tm, tn=td_out, tk=td_in)
    else:
        adj_p = _adjacency_device(n, n_p)      # cached, padded, bf16, on device
        if d_in <= d_out:
            # (A @ X) @ W : the N^2 term runs over the smaller Din.
            t = _pallas_matmul(adj_p, x_p, tm=tm, tn=td_in, tk=tk_adj)
            out_p = _pallas_matmul_bias_sigmoid(
                t.astype(jnp.bfloat16), w_p, b_p, tm=tm, tn=td_out, tk=td_in)
        else:
            # A @ (X @ W) : project once, then stream A against the support.
            s = _pallas_matmul(x_p, w_p, tm=tm, tn=td_out, tk=td_in)
            out_p = _pallas_matmul_bias_sigmoid(
                adj_p, s.astype(jnp.bfloat16), b_p, tm=tm, tn=td_out, tk=tk_adj)

    return out_p[:n, :d_out]


# ---------------------------------------------------------------------------
def init_params(key, input_dim, output_dim):
    # kaiming_uniform_(weight) with a=0: gain=sqrt(2), fan_in = weight.shape[1]
    fan_in = output_dim
    bound = np.sqrt(2.0) * np.sqrt(3.0 / fan_in)
    kw, _ = jax.random.split(key)
    weight = jax.random.uniform(
        kw, (input_dim, output_dim), jnp.float32, minval=-bound, maxval=bound)
    bias = jnp.zeros((output_dim,), jnp.float32)
    return weight, bias


if __name__ == "__main__":
    key = jax.random.PRNGKey(0)
    N, D_IN, D_OUT = 64, 32, 32

    k_x, k_p = jax.random.split(key)
    x = jax.random.normal(k_x, (N, D_IN), jnp.float32)
    weight, bias = init_params(k_p, D_IN, D_OUT)
    dummy_adj = jnp.zeros((N, N), jnp.float32)  # ignored, like in the reference

    # Fast (diagonal-adjacency) path — this is what the reference data hits.
    out = tma_graph_convolution(dummy_adj, x, weight, bias)
    out = jax.block_until_ready(out)

    # Also exercise the general dense path (projection + streaming A-matmul).
    out_dense = tma_graph_convolution(dummy_adj, x, weight, bias, force_dense=True)
    out_dense = jax.block_until_ready(out_dense)

    # Reference check (plain JAX, f32). bf16 MXU operands -> looser tolerance.
    adj_ref = jnp.asarray(build_adjacency(N)[0])
    ref = jax.nn.sigmoid(adj_ref @ (x @ weight) + bias)
    np.testing.assert_allclose(np.asarray(out), np.asarray(ref), rtol=2e-2, atol=2e-2)
    np.testing.assert_allclose(np.asarray(out_dense), np.asarray(ref), rtol=2e-2, atol=2e-2)

    print("KERNEL_OK")
</pallas_src>

<mosaic_0001>
module attributes {stable_mosaic.version = 11 : i64} {
  func.func @_diag_gcn_kernel(%arg0: i32, %arg1: i32, %arg2: i32, %arg3: memref<32x1xf32, #tpu.memory_space<vmem>>, %arg4: memref<32x128xbf16, #tpu.memory_space<vmem>>, %arg5: memref<128x128xbf16, #tpu.memory_space<vmem>>, %arg6: memref<1x128xf32, #tpu.memory_space<vmem>>, %arg7: memref<32x128xf32, #tpu.memory_space<vmem>>) attributes {dimension_semantics = [#tpu.dimension_semantics<parallel>, #tpu.dimension_semantics<parallel>, #tpu.dimension_semantics<arbitrary>], iteration_bounds = array<i64: 2, 1, 1>, scalar_prefetch = 0 : i64, scratch_operands = 0 : i64, tpu.core_type = #tpu.core_type<tc>, window_params = [{transform_indices = @transform_0, window_bounds = array<i64: 32, 1>}, {transform_indices = @transform_1, window_bounds = array<i64: 32, 128>}, {transform_indices = @transform_2, window_bounds = array<i64: 128, 128>}, {transform_indices = @transform_3, window_bounds = array<i64: 1, 128>}, {transform_indices = @transform_4, window_bounds = array<i64: 32, 128>}]} {
    %c0_i32 = arith.constant 0 : i32
    %0 = arith.cmpi eq, %arg2, %c0_i32 : i32
    %1 = arith.extui %0 : i1 to i32
    %c0_i32_0 = arith.constant 0 : i32
    %2 = arith.cmpi ne, %1, %c0_i32_0 : i32
    scf.if %2 {
      %cst_10 = arith.constant 0.000000e+00 : f32
      %12 = vector.broadcast %cst_10 : f32 to vector<32x128xf32>
      %c0_11 = arith.constant 0 : index
      %c0_12 = arith.constant 0 : index
      %13 = vector.load %arg7[%c0_11, %c0_12] : memref<32x128xf32, #tpu.memory_space<vmem>>, vector<32x128xf32>
      tpu.vector_store %arg7[%c0_11, %c0_12], %12 {strides = array<i32>} : memref<32x128xf32, #tpu.memory_space<vmem>>, vector<32x128xf32>,
    } else {
    }
    %c0 = arith.constant 0 : index
    %c0_1 = arith.constant 0 : index
    %3 = vector.load %arg7[%c0, %c0_1] : memref<32x128xf32, #tpu.memory_space<vmem>>, vector<32x128xf32>
    %c0_2 = arith.constant 0 : index
    %c0_3 = arith.constant 0 : index
    %4 = vector.load %arg4[%c0_2, %c0_3] : memref<32x128xbf16, #tpu.memory_space<vmem>>, vector<32x128xbf16>
    %c0_4 = arith.constant 0 : index
    %c0_5 = arith.constant 0 : index
    %5 = vector.load %arg5[%c0_4, %c0_5] : memref<128x128xbf16, #tpu.memory_space<vmem>>, vector<128x128xbf16>
    %cst = arith.constant dense<0.000000e+00> : vector<32x128xf32>
    %6 = tpu.matmul %4, %5, %cst {dimension_numbers = #tpu.dot_dimension_numbers<[1], [0], [0], [1], [0, 0, 1, 1], [], []>} : vector<32x128xbf16>, vector<128x128xbf16>, vector<32x128xf32> -> vector<32x128xf32>
    %7 = arith.addf %3, %6 : vector<32x128xf32>
    %c0_6 = arith.constant 0 : index
    %c0_7 = arith.constant 0 : index
    %8 = vector.load %arg7[%c0_6, %c0_7] : memref<32x128xf32, #tpu.memory_space<vmem>>, vector<32x128xf32>
    tpu.vector_store %arg7[%c0_6, %c0_7], %7 {strides = array<i32>} : memref<32x128xf32, #tpu.memory_space<vmem>>, vector<32x128xf32>,
    %c0_i32_8 = arith.constant 0 : i32
    %9 = arith.cmpi eq, %arg2, %c0_i32_8 : i32
    %10 = arith.extui %9 : i1 to i32
    %c0_i32_9 = arith.constant 0 : i32
    %11 = arith.cmpi ne, %10, %c0_i32_9 : i32
    scf.if %11 {
      %c0_10 = arith.constant 0 : index
      %c0_11 = arith.constant 0 : index
      %12 = vector.load %arg3[%c0_10, %c0_11] : memref<32x1xf32, #tpu.memory_space<vmem>>, vector<32x1xf32>
      %c0_12 = arith.constant 0 : index
      %c0_13 = arith.constant 0 : index
      %13 = vector.load %arg7[%c0_12, %c0_13] : memref<32x128xf32, #tpu.memory_space<vmem>>, vector<32x128xf32>
      %14 = vector.broadcast %12 : vector<32x1xf32> to vector<32x128xf32>
      %15 = arith.mulf %14, %13 : vector<32x128xf32>
      %c0_14 = arith.constant 0 : index
      %c0_15 = arith.constant 0 : index
      %16 = vector.load %arg6[%c0_14, %c0_15] : memref<1x128xf32, #tpu.memory_space<vmem>>, vector<1x128xf32>
      %17 = vector.broadcast %16 : vector<1x128xf32> to vector<32x128xf32>
      %18 = arith.addf %15, %17 : vector<32x128xf32>
      %19 = arith.negf %18 : vector<32x128xf32>
      %20 = math.exp %19 : vector<32x128xf32>
      %cst_16 = arith.constant 1.000000e+00 : f32
      %21 = vector.broadcast %cst_16 : f32 to vector<32x128xf32>
      %22 = arith.addf %21, %20 : vector<32x128xf32>
      %23 = arith.divf %21, %22 : vector<32x128xf32>
      %c0_17 = arith.constant 0 : index
      %c0_18 = arith.constant 0 : index
      %24 = vector.load %arg7[%c0_17, %c0_18] : memref<32x128xf32, #tpu.memory_space<vmem>>, vector<32x128xf32>
      tpu.vector_store %arg7[%c0_17, %c0_18], %23 {strides = array<i32>} : memref<32x128xf32, #tpu.memory_space<vmem>>, vector<32x128xf32>,
    } else {
    }
    return
  }
  func.func @transform_0(%arg0: i32, %arg1: i32, %arg2: i32) -> (i32, i32) {
    %c0_i32 = arith.constant 0 : i32
    %c0_i32_0 = arith.constant 0 : i32
    return %arg0, %c0_i32 : i32, i32
  }
  func.func @transform_1(%arg0: i32, %arg1: i32, %arg2: i32) -> (i32, i32) {
    %c0_i32 = arith.constant 0 : i32
    return %arg0, %arg2 : i32, i32
  }
  func.func @transform_2(%arg0: i32, %arg1: i32, %arg2: i32) -> (i32, i32) {
    %c0_i32 = arith.constant 0 : i32
    return %arg2, %arg1 : i32, i32
  }
  func.func @transform_3(%arg0: i32, %arg1: i32, %arg2: i32) -> (i32, i32) {
    %c0_i32 = arith.constant 0 : i32
    %c0_i32_0 = arith.constant 0 : i32
    return %c0_i32, %arg1 : i32, i32
  }
  func.func @transform_4(%arg0: i32, %arg1: i32, %arg2: i32) -> (i32, i32) {
    %c0_i32 = arith.constant 0 : i32
    return %arg0, %arg1 : i32, i32
  }
}

</mosaic_0001>

<llo_original>
// kernel: tpu_custom_call.1
$region0: #{tpu_custom_call.1}
  #allocation0 [shape = 'u32[]', space=smem, size = 0x4, offset = 0x4, fixed_abs, tag = 'smem constant byte address 0x4 - core index']
  #allocation1 [shape = 'u32[144,128]{1,0:T(1,128)}', space=vmem, size = 0x12000, scoped, tag = 'internal scratch']
  %s0 = inlined_call_operand.vmem [shape: f32[64,1], index: 0, kind: input, shape index: {}]
  %s1 = inlined_call_operand.hbm [shape: bf16[64,128], index: 1, kind: input, shape index: {}]
  %s2 = inlined_call_operand.vmem [shape: bf16[128,128], index: 2, kind: input, shape index: {}]
  %s3 = inlined_call_operand.vmem [shape: f32[1,128], index: 3, kind: input, shape index: {}]
  %s4 = inlined_call_operand.hbm [shape: f32[64,128], index: 4, kind: output, shape index: {}]
  %s5 = sld [smem:[#allocation0]]
  $region61: #{tpu_custom_call.1} parent=0
    _
  %s7 = ssub.s32 1, %s5
  %s8 = scalar_select 0, %s7, %s5
  $region1: #{tpu_custom_call.1} parent=0
    #allocation2 [shape = 'u8[16384]{0}', space=vmem, size = 0x4000, scoped, tag = 'input window, operand 1']
    #allocation3 [shape = 's32[2]{0}', space=sflag, size = 0x8, scoped, tag = 'scoped memory for tpu_custom_call.1']
    #allocation4 [shape = 's32[2]{0}', space=sflag, size = 0x8, scoped, tag = 'scoped memory for tpu_custom_call.1']
    #allocation5 [shape = 'u8[32768]{0}', space=vmem, size = 0x8000, scoped, tag = 'output window, operand 0']
    %9 = vsyncpa [#allocation3], 0
    %s10 = scalar_lea.sflag [#allocation3], 1
    %11 = vsyncpa %s10, 0
    %12 = vsyncpa [#allocation4], 0
    %s13 = scalar_lea.sflag [#allocation4], 1
    %14 = vsyncpa %s13, 0
    loop: start=0, step=1, limit=4
    $region2: #{tpu_custom_call.1} parent=1 // loop_pre_header
      _
    $region3: #{tpu_custom_call.1} parent=1 // loop_header
      %s16 = sphi 0, %s20
      %p17 = scmp.ge.s32.totalorder %s16, 4
      %s23 = sphi 0, %s42
      %s24 = sphi 0, %s38
      %s25 = sphi 0, %s34
      %s26 = sphi 0, %s23
      %s27 = sphi 0, %s24
      %s28 = sphi 0, %s25
      %s29 = sphi 0, %s26
      %s30 = sphi 0, %s27
      %s31 = sphi 0, %s28
      %s45 = sphi 0, %s47
      %s48 = sphi 0, %s45
      %s49 = sphi 0, %s48
      %s65 = sphi 0, %s49
      %s73 = sphi 0, %s75
      %s76 = sphi 0, %s73
      %s77 = sphi 0, %s76
      %s93 = sphi 0, %s77
      %s101 = sphi 0, %s103
      %s104 = sphi 0, %s101
      %s105 = sphi 0, %s104
      %s121 = sphi 0, %s105
      %s127 = sphi 0, %s129
      %s130 = sphi 0, %s127
      %s131 = sphi 0, %s130
      %s147 = sphi 0, %s131
      %s155 = sphi 0, %s157
      %s158 = sphi 0, %s155
      %s159 = sphi 0, %s158
      %s175 = sphi 0, %s159
    $region4: #{tpu_custom_call.1} parent=1 // loop_header_branch
      %19 = sbr.rel (%p17) target = $region8
    $region5: #{tpu_custom_call.1} parent=1 // loop_body
      %s21 = ssub.s32 %s16, 1
      %s22 = ssub.s32 %s16, 2
      %s32 = sadd.s32 1, %s25
      %p33 = scmp.ge.s32.totalorder %s32, 1
      %s34 = scalar_select %p33, 0, %s32
      %s35 = sadd.s32 1, %s24
      %s36 = scalar_select %p33, %s35, %s24
      %p37 = scmp.ge.s32.totalorder %s36, 1
      %s38 = scalar_select %p37, 0, %s36
      %s39 = sadd.s32 1, %s23
      %s40 = scalar_select %p37, %s39, %s23
      %p41 = scmp.ge.s32.totalorder %s40, 2
      %s42 = scalar_select %p41, 0, %s40
      %s43 = ssub.s32 %s23, %s42
      %p44 = scmp.eq.s32.totalorder %s43, 0
      %s46 = sadd.s32 %s45, 1
      %s47 = scalar_select %p44, %s45, %s46
      %p50 = pneg %p44
      %p51 = scmp.eq.s32.totalorder %s16, 1
      %p52 = por %p50, %p51
      %p53 = scmp.ne.s32.totalorder %s45, %s48
      %p54 = scmp.eq.s32.totalorder %s16, 0
      %p55 = por %p53, %p54
      %p56 = scmp.ne.s32.totalorder %s45, %s48
      %p57 = scmp.eq.s32.totalorder %s21, 1
      %p58 = por %p56, %p57
      %p59 = scmp.ne.s32.totalorder %s48, %s49
      %p60 = scmp.eq.s32.totalorder %s21, 0
      %p61 = por %p59, %p60
      %p62 = scmp.ne.s32.totalorder %s48, %s49
      %p63 = scmp.eq.s32.totalorder %s22, 1
      %p64 = por %p62, %p63
      %p66 = scmp.ne.s32.totalorder %s49, %s65
      %p67 = scmp.eq.s32.totalorder %s22, 0
      %p68 = por %p66, %p67
      %s69 = ssub.s32 %s23, %s42
      %s70 = ssub.s32 %s25, %s34
      %s71 = sor.u32 %s69, %s70
      %p72 = scmp.eq.s32.totalorder %s71, 0
      %s74 = sadd.s32 %s73, 1
      %s75 = scalar_select %p72, %s73, %s74
      %p78 = pneg %p72
      %p79 = scmp.eq.s32.totalorder %s16, 1
      %p80 = por %p78, %p79
      %p81 = scmp.ne.s32.totalorder %s73, %s76
      %p82 = scmp.eq.s32.totalorder %s16, 0
      %p83 = por %p81, %p82
      %p84 = scmp.ne.s32.totalorder %s73, %s76
      %p85 = scmp.eq.s32.totalorder %s21, 1
      %p86 = por %p84, %p85
      %p87 = scmp.ne.s32.totalorder %s76, %s77
      %p88 = scmp.eq.s32.totalorder %s21, 0
      %p89 = por %p87, %p88
      %p90 = scmp.ne.s32.totalorder %s76, %s77
      %p91 = scmp.eq.s32.totalorder %s22, 1
      %p92 = por %p90, %p91
      %p94 = scmp.ne.s32.totalorder %s77, %s93
      %p95 = scmp.eq.s32.totalorder %s22, 0
      %p96 = por %p94, %p95
      %s97 = ssub.s32 %s25, %s34
      %s98 = ssub.s32 %s24, %s38
      %s99 = sor.u32 %s97, %s98
      %p100 = scmp.eq.s32.totalorder %s99, 0
      %s102 = sadd.s32 %s101, 1
      %s103 = scalar_select %p100, %s101, %s102
      %p106 = pneg %p100
      %p107 = scmp.eq.s32.totalorder %s16, 1
      %p108 = por %p106, %p107
      %p109 = scmp.ne.s32.totalorder %s101, %s104
      %p110 = scmp.eq.s32.totalorder %s16, 0
      %p111 = por %p109, %p110
      %p112 = scmp.ne.s32.totalorder %s101, %s104
      %p113 = scmp.eq.s32.totalorder %s21, 1
      %p114 = por %p112, %p113
      %p115 = scmp.ne.s32.totalorder %s104, %s105
      %p116 = scmp.eq.s32.totalorder %s21, 0
      %p117 = por %p115, %p116
      %p118 = scmp.ne.s32.totalorder %s104, %s105
      %p119 = scmp.eq.s32.totalorder %s22, 1
      %p120 = por %p118, %p119
      %p122 = scmp.ne.s32.totalorder %s105, %s121
      %p123 = scmp.eq.s32.totalorder %s22, 0
      %p124 = por %p122, %p123
      %s125 = ssub.s32 %s24, %s38
      %p126 = scmp.eq.s32.totalorder %s125, 0
      %s128 = sadd.s32 %s127, 1
      %s129 = scalar_select %p126, %s127, %s128
      %p132 = pneg %p126
      %p133 = scmp.eq.s32.totalorder %s16, 1
      %p134 = por %p132, %p133
      %p135 = scmp.ne.s32.totalorder %s127, %s130
      %p136 = scmp.eq.s32.totalorder %s16, 0
      %p137 = por %p135, %p136
      %p138 = scmp.ne.s32.totalorder %s127, %s130
      %p139 = scmp.eq.s32.totalorder %s21, 1
      %p140 = por %p138, %p139
      %p141 = scmp.ne.s32.totalorder %s130, %s131
      %p142 = scmp.eq.s32.totalorder %s21, 0
      %p143 = por %p141, %p142
      %p144 = scmp.ne.s32.totalorder %s130, %s131
      %p145 = scmp.eq.s32.totalorder %s22, 1
      %p146 = por %p144, %p145
      %p148 = scmp.ne.s32.totalorder %s131, %s147
      %p149 = scmp.eq.s32.totalorder %s22, 0
      %p150 = por %p148, %p149
      %s151 = ssub.s32 %s23, %s42
      %s152 = ssub.s32 %s24, %s38
      %s153 = sor.u32 %s151, %s152
      %p154 = scmp.eq.s32.totalorder %s153, 0
      %s156 = sadd.s32 %s155, 1
      %s157 = scalar_select %p154, %s155, %s156
      %p160 = pneg %p154
      %p161 = scmp.eq.s32.totalorder %s16, 1
      %p162 = por %p160, %p161
      %p163 = scmp.ne.s32.totalorder %s155, %s158
      %p164 = scmp.eq.s32.totalorder %s16, 0
      %p165 = por %p163, %p164
      %p166 = scmp.ne.s32.totalorder %s155, %s158
      %p167 = scmp.eq.s32.totalorder %s21, 1
      %p168 = por %p166, %p167
      %p169 = scmp.ne.s32.totalorder %s158, %s159
      %p170 = scmp.eq.s32.totalorder %s21, 0
      %p171 = por %p169, %p170
      %p172 = scmp.ne.s32.totalorder %s158, %s159
      %p173 = scmp.eq.s32.totalorder %s22, 1
      %p174 = por %p172, %p173
      %p176 = scmp.ne.s32.totalorder %s159, %s175
      %p177 = scmp.eq.s32.totalorder %s22, 0
      %p178 = por %p176, %p177
      %p179 = scmp.le.s32.totalorder 1, %s16
      %p180 = scmp.lt.s32.totalorder %s16, 3
      %p181 = pnand %p179, %p180
      %p182 = pneg %p181
      // Predicated region
      $region9: #{tpu_custom_call.1} parent=5 // pred_check
        _
      $region10: #{tpu_custom_call.1} parent=5 // pred_check_branch
        %184 = sbr.rel (%p181) target = $region12
      $region11: #{tpu_custom_call.1} parent=5 // pred_region
        %s185 = ssub.s32 %s16, 1
        // Predicated region
        $region13: #{tpu_custom_call.1} parent=11 // pred_check
          %p186 = pneg %p117
        $region14: #{tpu_custom_call.1} parent=11 // pred_check_branch
          %188 = sbr.rel (%p186) target = $region16
        $region15: #{tpu_custom_call.1} parent=11 // pred_region
          %s189 = smul.u32 16, %s28
          %p190 = scmp.lt.s32.totalorder %s189, 15
          %s191 = scalar_select %p190, %s189, 15
          %p192 = scmp.lt.s32.totalorder %s27, 0
          %s193 = scalar_select %p192, %s27, 0
          %s194 = sadd.s32 %s193, %s191
          %s195 = smul.addr %s194, 4
          %s196 = scalar_lea.vmem %s2, %s195
          %s197 = smul.u32 16, %s28
        $region16: #{tpu_custom_call.1} parent=11 // pred_fallthru
          _
        // Predicated region
        $region17: #{tpu_custom_call.1} parent=11 // pred_check
          %p198 = pneg %p143
        $region18: #{tpu_custom_call.1} parent=11 // pred_check_branch
          %200 = sbr.rel (%p198) target = $region20
        $region19: #{tpu_custom_call.1} parent=11 // pred_region
          %p201 = scmp.lt.s32.totalorder %s27, 0
          %s202 = scalar_select %p201, %s27, 0
          %s203 = scalar_lea.vmem %s3, %s202
        $region20: #{tpu_custom_call.1} parent=11 // pred_fallthru
          _
      $region12: #{tpu_custom_call.1} parent=5 // pred_fallthru
        _
      %p204 = scmp.lt.s32.totalorder %s16, 2
      // Predicated region
      $region21: #{tpu_custom_call.1} parent=5 // pred_check
        %p205 = pneg %p204
      $region22: #{tpu_custom_call.1} parent=5 // pred_check_branch
        %207 = sbr.rel (%p205) target = $region24
      $region23: #{tpu_custom_call.1} parent=5 // pred_region
        // Predicated region
        $region25: #{tpu_custom_call.1} parent=23 // pred_check
          %p208 = pneg %p55
        $region26: #{tpu_custom_call.1} parent=23 // pred_check_branch
          %210 = sbr.rel (%p208) target = $region28
        $region27: #{tpu_custom_call.1} parent=23 // pred_region
          %s211 = smul.u32 4, %s23
          %p212 = scmp.lt.s32.totalorder %s211, 7
          %s213 = scalar_select %p212, %s211, 7
          %s214 = smul.addr %s213, 8
          %s215 = scalar_lea.vmem %s0, %s214
          %s216 = smul.u32 4, %s23
        $region28: #{tpu_custom_call.1} parent=23 // pred_fallthru
          _
        // Predicated region
        $region29: #{tpu_custom_call.1} parent=23 // pred_check
          %p217 = pneg %p83
        $region30: #{tpu_custom_call.1} parent=23 // pred_check_branch
          %219 = sbr.rel (%p217) target = $region32
        $region31: #{tpu_custom_call.1} parent=23 // pred_region
          %s220 = sand.u32 %s73, 1
          %s221 = scalar_lea.sflag [#allocation3], %s220
          %s222 = sand.u32 %s73, 1
          %s223 = smul.addr %s222, 16
          %s224 = scalar_lea.vmem [#allocation2], %s223
          %s225 = smul.u32 4, %s23
          %s227 = ssub.s32 256, 256
          %228 = vsyncadd %s221, %s227
          %s229 = sadd.s32 %s25, %s225
          %s230 = smul.addr %s229, 64
          %s231 = scalar_lea.hbm %s1, %s230
          %s232 = sshll.u32 %s224, 4
          %s233 = int_to_ptr.vmem [resolvable:$true] %s232
          %238 = dma.hbm_to_vmem [thread:$0]  %s231, 256, %s233, %s221, 64, 64, 4
        $region32: #{tpu_custom_call.1} parent=23 // pred_fallthru
          _
      $region24: #{tpu_custom_call.1} parent=5 // pred_fallthru
        _
      %p239 = scmp.le.s32.totalorder 1, %s16
      %p240 = scmp.lt.s32.totalorder %s16, 3
      %p241 = pnand %p239, %p240
      %p242 = pneg %p241
      // Predicated region
      $region33: #{tpu_custom_call.1} parent=5 // pred_check
        _
      $region34: #{tpu_custom_call.1} parent=5 // pred_check_branch
        %244 = sbr.rel (%p241) target = $region36
      $region35: #{tpu_custom_call.1} parent=5 // pred_region
        %s245 = ssub.s32 %s16, 1
        %s246 = sand.u32 %s76, 1
        %s247 = scalar_lea.sflag [#allocation3], %s246
        %s248 = sand.u32 %s76, 1
        %s249 = smul.addr %s248, 16
        %s250 = scalar_lea.vmem [#allocation2], %s249
        // Predicated region
        $region37: #{tpu_custom_call.1} parent=35 // pred_check
          %p251 = pneg %p89
        $region38: #{tpu_custom_call.1} parent=35 // pred_check_branch
          %253 = sbr.rel (%p251) target = $region40
        $region39: #{tpu_custom_call.1} parent=35 // pred_region
          %254 = dma.done %s247, 256
        $region40: #{tpu_custom_call.1} parent=35 // pred_fallthru
          _
        %s255 = smul.u32 4, %s26
        %p256 = scmp.lt.s32.totalorder %s255, 7
        %s257 = scalar_select %p256, %s255, 7
        %s258 = smul.addr %s257, 8
        %s259 = scalar_lea.vmem %s0, %s258
        %p260 = pneg %p61
        %p261 = pneg %p58
        %s262 = sand.u32 %s76, 1
        %s263 = scalar_lea.sflag [#allocation3], %s262
        %s264 = sand.u32 %s76, 1
        %s265 = smul.addr %s264, 16
        %s266 = scalar_lea.vmem [#allocation2], %s265
        %p267 = pneg %p89
        %p268 = pneg %p86
        %s269 = smul.u32 16, %s28
        %p270 = scmp.lt.s32.totalorder %s269, 15
        %s271 = scalar_select %p270, %s269, 15
        %p272 = scmp.lt.s32.totalorder %s27, 0
        %s273 = scalar_select %p272, %s27, 0
        %s274 = sadd.s32 %s273, %s271
        %s275 = smul.addr %s274, 4
        %s276 = scalar_lea.vmem %s2, %s275
        %p277 = pneg %p117
        %p278 = pneg %p114
        %p279 = scmp.lt.s32.totalorder %s27, 0
        %s280 = scalar_select %p279, %s27, 0
        %s281 = scalar_lea.vmem %s3, %s280
        %p282 = pneg %p143
        %p283 = pneg %p140
        %p284 = pneg %p171
        %p285 = pneg %p168
        %s286 = sand.u32 %s158, 1
        %s287 = scalar_lea.sflag [#allocation4], %s286
        %s288 = sand.u32 %s158, 1
        %s289 = smul.addr %s288, 32
        %s290 = scalar_lea.vmem [#allocation5], %s289
        %s291 = smul.u32 4, %s26
        %p292 = scmp.lt.s32.totalorder %s291, 7
        %s293 = scalar_select %p292, %s291, 7
        %s294 = smul.addr %s293, 8
        %s295 = scalar_lea.vmem %s0, %s294
        %s296 = smul.u32 4, %s26
        %s297 = smul.u32 4, %s26
        %s298 = smul.u32 16, %s28
        %p299 = scmp.lt.s32.totalorder %s298, 15
        %s300 = scalar_select %p299, %s298, 15
        %p301 = scmp.lt.s32.totalorder %s27, 0
        %s302 = scalar_select %p301, %s27, 0
        %s303 = sadd.s32 %s302, %s300
        %s304 = smul.addr %s303, 4
        %s305 = scalar_lea.vmem %s2, %s304
        %s306 = smul.u32 16, %s28
        %p307 = scmp.lt.s32.totalorder %s27, 0
        %s308 = scalar_select %p307, %s27, 0
        %s309 = scalar_lea.vmem %s3, %s308
        %s310 = smul.u32 4, %s26
        %p312 = scmp.eq.s32.totalorder %s28, 0
        // Predicated region
        $region41: #{tpu_custom_call.1} parent=35 // pred_check
          %p313 = pneg %p312
        $region42: #{tpu_custom_call.1} parent=35 // pred_check_branch
          %315 = sbr.rel (%p313) target = $region44
        $region43: #{tpu_custom_call.1} parent=35 // pred_region
          %316 = vst [vmem:[%s290] sm:$0xff] 0.0
          %317 = vst [vmem:[%s290 + $0x8] sm:$0xff] 0.0
          %318 = vst [vmem:[%s290 + $0x10] sm:$0xff] 0.0
          %319 = vst [vmem:[%s290 + $0x18] sm:$0xff] 0.0
        $region44: #{tpu_custom_call.1} parent=35 // pred_fallthru
          _
        %v320 = vld [vmem:[%s290] sm:$0xff]
        %v321 = vld [vmem:[%s290 + $0x8] sm:$0xff]
        %v322 = vld [vmem:[%s290 + $0x10] sm:$0xff]
        %v323 = vld [vmem:[%s290 + $0x18] sm:$0xff]
        %v324 = vld [vmem:[%s250] sm:$0xf]
        %v325 = vld [vmem:[%s250 + $0x4] sm:$0xf]
        %v326 = vld [vmem:[%s250 + $0x8] sm:$0xf]
        %v327 = vld [vmem:[%s250 + $0xc] sm:$0xf]
        %v328 = vld [vmem:[%s305] sm:$0xf]
        %v329 = vld [vmem:[%s305 + $0x4] sm:$0xf]
        %v330 = vld [vmem:[%s305 + $0x8] sm:$0xf]
        %v331 = vld [vmem:[%s305 + $0xc] sm:$0xf]
        %v332 = vld [vmem:[%s305 + $0x10] sm:$0xf]
        %v333 = vld [vmem:[%s305 + $0x14] sm:$0xf]
        %v334 = vld [vmem:[%s305 + $0x18] sm:$0xf]
        %v335 = vld [vmem:[%s305 + $0x1c] sm:$0xf]
        %v336 = vld [vmem:[%s305 + $0x20] sm:$0xf]
        %v337 = vld [vmem:[%s305 + $0x24] sm:$0xf]
        %v338 = vld [vmem:[%s305 + $0x28] sm:$0xf]
        %v339 = vld [vmem:[%s305 + $0x2c] sm:$0xf]
        %v340 = vld [vmem:[%s305 + $0x30] sm:$0xf]
        %v341 = vld [vmem:[%s305 + $0x34] sm:$0xf]
        %v342 = vld [vmem:[%s305 + $0x38] sm:$0xf]
        %v343 = vld [vmem:[%s305 + $0x3c] sm:$0xf]
        %v348 = vunpack.c.l.b16 %v324
        %v349 = vunpack.c.l.b16 %v325
        %v350 = vunpack.c.l.b16 %v326
        %v351 = vunpack.c.l.b16 %v327
        %v352 = vpack.c.b16 %v349, %v348
        %v353 = vpack.c.b16 %v351, %v350
        %v372 = vunpack.c.l.b16 %v328
        %v373 = vunpack.c.l.b16 %v329
        %v374 = vunpack.c.l.b16 %v330
        %v375 = vunpack.c.l.b16 %v331
        %v376 = vunpack.c.l.b16 %v332
        %v377 = vunpack.c.l.b16 %v333
        %v378 = vunpack.c.l.b16 %v334
        %v379 = vunpack.c.l.b16 %v335
        %v380 = vunpack.c.l.b16 %v336
        %v381 = vunpack.c.l.b16 %v337
        %v382 = vunpack.c.l.b16 %v338
        %v383 = vunpack.c.l.b16 %v339
        %v384 = vunpack.c.l.b16 %v340
        %v385 = vunpack.c.l.b16 %v341
        %v386 = vunpack.c.l.b16 %v342
        %v387 = vunpack.c.l.b16 %v343
        %v388 = vpack.c.b16 %v373, %v372
        %v389 = vpack.c.b16 %v375, %v374
        %v390 = vpack.c.b16 %v377, %v376
        %v391 = vpack.c.b16 %v379, %v378
        %v392 = vpack.c.b16 %v381, %v380
        %v393 = vpack.c.b16 %v383, %v382
        %v394 = vpack.c.b16 %v385, %v384
        %v395 = vpack.c.b16 %v387, %v386
        %404 = vmatprep.subr.bf16.mxu0 0
        %405 = vmatpush1.bf16.msra.mxu0 %v388
        %406 = vmatprep.subr.bf16.mxu0 0
        %407 = vmatpush1.bf16.msra.mxu0 %v389
        %408 = vmatprep.subr.bf16.mxu0 0
        %409 = vmatpush1.bf16.msra.mxu0 %v390
        %410 = vmatprep.subr.bf16.mxu0 0
        %411 = vmatpush1.bf16.msra.mxu0 %v391
        %412 = vmatprep.subr.bf16.mxu0 0
        %413 = vmatpush1.bf16.msra.mxu0 %v392
        %414 = vmatprep.subr.bf16.mxu0 0
        %415 = vmatpush1.bf16.msra.mxu0 %v393
        %416 = vmatprep.subr.bf16.mxu0 0
        %417 = vmatpush1.bf16.msra.mxu0 %v394
        %418 = vmatprep.subr.bf16.mxu0 0
        %419 = vmatpush1.bf16.msra.mxu0 %v395
        %420 = vmatprep.subr.bf16.mxu0 0
        %421 = vmatpush1.bf16.msra.mxu0 0
        %422 = vmatprep.subr.bf16.mxu0 0
        %423 = vmatpush1.bf16.msra.mxu0 0
        %424 = vmatprep.subr.bf16.mxu0 0
        %425 = vmatpush1.bf16.msra.mxu0 0
        %426 = vmatprep.subr.bf16.mxu0 0
        %427 = vmatpush1.bf16.msra.mxu0 0
        %428 = vmatprep.subr.bf16.mxu0 0
        %429 = vmatpush1.bf16.msra.mxu0 0
        %430 = vmatprep.subr.bf16.mxu0 0
        %431 = vmatpush1.bf16.msra.mxu0 0
        %432 = vmatprep.subr.bf16.mxu0 0
        %433 = vmatpush1.bf16.msra.mxu0 0
        %434 = vmatprep.subr.bf16.mxu0 0
        %435 = vmatpush1.bf16.msra.mxu0 0
        %436 = vmatprep.mubr.bf16.mxu0 0
        %437 = vmatmul.mubr.bf16.gmra.mrb[0].mxu0 %v352
        %v438 = vpop.f32.mrb[0].mxu0
        %v439 = vadd.f32 0.0, %v438
        %v440 = vpop.f32.mrb[0].mxu0
        %v441 = vpop.f32.mrb[0].mxu0
        %v442 = vadd.f32 0.0, %v441
        %v443 = vpop.f32.mrb[0].mxu0
        %444 = vmatprep.mubr.bf16.mxu0 0
        %445 = vmatmul.mubr.bf16.gmra.mrb[0].mxu0 %v353
        %v446 = vpop.f32.mrb[0].mxu0
        %v447 = vadd.f32 0.0, %v446
        %v448 = vpop.f32.mrb[0].mxu0
        %v449 = vpop.f32.mrb[0].mxu0
        %v450 = vadd.f32 0.0, %v449
        %v451 = vpop.f32.mrb[0].mxu0
        %452 = vdwg.mxu0
        %v453 = vadd.f32 %v320, %v439
        %v454 = vadd.f32 %v321, %v442
        %v455 = vadd.f32 %v322, %v447
        %v456 = vadd.f32 %v323, %v450
        %457 = vst [vmem:[%s290] sm:$0xff] %v453
        %458 = vst [vmem:[%s290 + $0x8] sm:$0xff] %v454
        %459 = vst [vmem:[%s290 + $0x10] sm:$0xff] %v455
        %460 = vst [vmem:[%s290 + $0x18] sm:$0xff] %v456
        // Predicated region
        $region45: #{tpu_custom_call.1} parent=35 // pred_check
          %p461 = pneg %p312
        $region46: #{tpu_custom_call.1} parent=35 // pred_check_branch
          %463 = sbr.rel (%p461) target = $region48
        $region47: #{tpu_custom_call.1} parent=35 // pred_region
          %v464 = vld [vmem:[%s295] sm:$0xff]
          %v465 = vld [vmem:[%s295 + $0x8] sm:$0xff]
          %v466 = vld [vmem:[%s295 + $0x10] sm:$0xff]
          %v467 = vld [vmem:[%s295 + $0x18] sm:$0xff]
          %v468 = vld [vmem:[%s290] sm:$0xff]
          %v469 = vld [vmem:[%s290 + $0x8] sm:$0xff]
          %v470 = vld [vmem:[%s290 + $0x10] sm:$0xff]
          %v471 = vld [vmem:[%s290 + $0x18] sm:$0xff]
          %473 = vset.pattern.permute.xlu0 0
          %474 = vperm.xlu0 %473, %v464
          %v475 = vpop.permute.xlu0 %474
          %478 = vset.pattern.permute.xlu0 0
          %479 = vperm.xlu0 %478, %v465
          %v480 = vpop.permute.xlu0 %479
          %483 = vset.pattern.permute.xlu0 0
          %484 = vperm.xlu0 %483, %v466
          %v485 = vpop.permute.xlu0 %484
          %488 = vset.pattern.permute.xlu0 0
          %489 = vperm.xlu0 %488, %v467
          %v490 = vpop.permute.xlu0 %489
          %v492 = vmul.f32 %v475, %v468
          %v493 = vmul.f32 %v480, %v469
          %v494 = vmul.f32 %v485, %v470
          %v495 = vmul.f32 %v490, %v471
          %v496 = vld [vmem:[%s309] sm:$0x1]
          %v498 = vlaneseq
          %v499 = vshrl.u32 %v498, 7
          %v500 = vsub.s32 0, %v499
          %v501 = vrot.slane %v496, %v500
          %v503 = vadd.f32 %v492, %v501
          %v504 = vadd.f32 %v493, %v501
          %v505 = vadd.f32 %v494, %v501
          %v506 = vadd.f32 %v495, %v501
          %v507 = vxor.u32 %v503, 2147483648
          %v508 = vxor.u32 %v504, 2147483648
          %v509 = vxor.u32 %v505, 2147483648
          %v510 = vxor.u32 %v506, 2147483648
          %v511 = vmul.f32 %v507, 1.442695
          %v512 = vpow.pop %v511
          %v513 = vmul.f32 %v508, 1.442695
          %v514 = vpow.pop %v513
          %v515 = vmul.f32 %v509, 1.442695
          %v516 = vpow.pop %v515
          %v517 = vmul.f32 %v510, 1.442695
          %v518 = vpow.pop %v517
          %v519 = vadd.f32 %v512, 1.0
          %v520 = vadd.f32 %v514, 1.0
          %v521 = vadd.f32 %v516, 1.0
          %v522 = vadd.f32 %v518, 1.0
          %v523 = vrcp.pop %v519
          %v524 = vmul.f32 1.0, %v523
          %v525 = vrcp.pop %v520
          %v526 = vmul.f32 1.0, %v525
          %v527 = vrcp.pop %v521
          %v528 = vmul.f32 1.0, %v527
          %v529 = vrcp.pop %v522
          %v530 = vmul.f32 1.0, %v529
          %531 = vst [vmem:[%s290] sm:$0xff] %v524
          %532 = vst [vmem:[%s290 + $0x8] sm:$0xff] %v526
          %533 = vst [vmem:[%s290 + $0x10] sm:$0xff] %v528
          %534 = vst [vmem:[%s290 + $0x18] sm:$0xff] %v530
        $region48: #{tpu_custom_call.1} parent=35 // pred_fallthru
          _
        %s535 = sand.u32 %s158, 1
        %s536 = scalar_lea.sflag [#allocation4], %s535
        %s537 = sand.u32 %s158, 1
        %s538 = smul.addr %s537, 32
        %s539 = scalar_lea.vmem [#allocation5], %s538
        // Predicated region
        $region49: #{tpu_custom_call.1} parent=35 // pred_check
          %p540 = pneg %p168
        $region50: #{tpu_custom_call.1} parent=35 // pred_check_branch
          %542 = sbr.rel (%p540) target = $region52
        $region51: #{tpu_custom_call.1} parent=35 // pred_region
          %s543 = smul.u32 4, %s26
          %s545 = ssub.s32 512, 512
          %546 = vsyncadd %s536, %s545
          %s547 = sadd.s32 %s27, %s543
          %s548 = smul.addr %s547, 128
          %s549 = scalar_lea.hbm %s4, %s548
          %s550 = sshll.u32 %s539, 4
          %s551 = int_to_ptr.vmem [resolvable:$true] %s550
          %556 = dma.vmem_to_hbm [thread:$0]  %s551, 512, %s549, %s536, 128, 128, 8
        $region52: #{tpu_custom_call.1} parent=35 // pred_fallthru
          _
      $region36: #{tpu_custom_call.1} parent=5 // pred_fallthru
        _
      %p557 = scmp.le.s32.totalorder 2, %s16
      // Predicated region
      $region53: #{tpu_custom_call.1} parent=5 // pred_check
        %p558 = pneg %p557
      $region54: #{tpu_custom_call.1} parent=5 // pred_check_branch
        %560 = sbr.rel (%p558) target = $region56
      $region55: #{tpu_custom_call.1} parent=5 // pred_region
        %s561 = ssub.s32 %s16, 2
        // Predicated region
        $region57: #{tpu_custom_call.1} parent=55 // pred_check
          %p562 = pneg %p174
        $region58: #{tpu_custom_call.1} parent=55 // pred_check_branch
          %564 = sbr.rel (%p562) target = $region60
        $region59: #{tpu_custom_call.1} parent=55 // pred_region
          %s565 = sand.u32 %s159, 1
          %s566 = scalar_lea.sflag [#allocation4], %s565
          %s567 = sand.u32 %s159, 1
          %s568 = smul.addr %s567, 32
          %s569 = scalar_lea.vmem [#allocation5], %s568
          %570 = dma.done %s566, 512
        $region60: #{tpu_custom_call.1} parent=55 // pred_fallthru
          _
      $region56: #{tpu_custom_call.1} parent=5 // pred_fallthru
        _
    $region6: #{tpu_custom_call.1} parent=1 // loop_footer
      %s20 = sadd.s32 1, %s16
    $region7: #{tpu_custom_call.1} parent=1 // loop_footer_branch
      %15 = sbr.rel target = $region3
    $region8: #{tpu_custom_call.1} parent=1 // loop_exit
      _
    %571 = vsyncpa [#allocation3], 1
    %s572 = scalar_lea.sflag [#allocation3], 1
    %573 = vsyncpa %s572, 1
    %574 = vsyncpa [#allocation4], 1
    %s575 = scalar_lea.sflag [#allocation4], 1
    %576 = vsyncpa %s575, 1

</llo_original>
